<compile_context>
chip_gen: v5e
topology: v5e:2x2
jax: 0.10.0
libtpu: 0.0.40
codegen_flags: <defaults>
</compile_context>

<pallas_src>
import functools

import jax
import jax.numpy as jnp
from jax.experimental import pallas as pl
from jax.experimental.pallas import tpu as pltpu


def _center_loss_kernel(t_ref, x_ref, c_ref, o_ref, *, batch_size, num_classes):
    # t_ref: (B,) int32 targets in SMEM (scalar prefetch; consumed by the index_maps).
    # x_ref: (1, 1, D) feature row for this grid step.
    # c_ref: (1, 1, D) gathered center row c_{t_i} for this grid step.
    # o_ref: (1, 1) f32 output block, resident across the whole grid (accumulator).
    i = pl.program_id(0)

    @pl.when(i == 0)
    def _init():
        o_ref[...] = jnp.zeros_like(o_ref)

    x = x_ref[...].astype(jnp.float32)          # (1, 1, D)
    c = c_ref[...].astype(jnp.float32)          # (1, 1, D)
    diff = x - c
    d2 = jnp.sum(diff * diff, axis=-1)          # (1, 1) — reduce before the sqrt
    dist = jnp.clip(jnp.sqrt(d2), 1e-12, 1e12)  # one sqrt / clamp per row

    o_ref[...] = o_ref[...] + dist

    @pl.when(i == pl.num_programs(0) - 1)
    def _finalize():
        # The PyTorch reference clamps the B*(C-1) masked-out zeros to 1e-12 and
        # sums them too; add that constant back so semantics match exactly.
        extra = jnp.float32(batch_size * (num_classes - 1)) * jnp.float32(1e-12)
        o_ref[...] = (o_ref[...] + extra) / jnp.float32(batch_size)


def center_loss(inputs, center, targets):
    """Pallas implementation of CenterLoss.forward.

    Args:
      inputs:  (batch, feature_dim) float array (native dtype; cast in-kernel).
      center:  (num_classes, feature_dim) float array (the learned parameter).
      targets: (batch,) integer array of class ids.
    Returns:
      scalar float32 loss.
    """
    B, D = inputs.shape
    C, Dc = center.shape
    assert D == Dc

    # Reshape to (rows, 1, D) so every block's last two dims equal the full array
    # dims (satisfies the (8, 128) block rule for any B / C / D). Free in XLA.
    x3 = inputs.reshape(B, 1, D)
    c3 = center.reshape(C, 1, D)
    t = targets.astype(jnp.int32)

    itemsize = jnp.dtype(inputs.dtype).itemsize
    cost = pl.CostEstimate(
        flops=3 * B * D,
        transcendentals=B,
        bytes_accessed=B * D * itemsize + B * D * jnp.dtype(center.dtype).itemsize
        + B * 4 + 4,
    )

    out = pl.pallas_call(
        functools.partial(_center_loss_kernel, batch_size=B, num_classes=C),
        out_shape=jax.ShapeDtypeStruct((1, 1), jnp.float32),
        grid_spec=pltpu.PrefetchScalarGridSpec(
            num_scalar_prefetch=1,           # targets -> SMEM, feeds the index_maps
            grid=(B,),
            in_specs=[
                # inputs: row i of the batch.
                pl.BlockSpec((1, 1, D), lambda i, t: (i, 0, 0)),
                # centers: data-dependent gather of row targets[i].
                pl.BlockSpec((1, 1, D), lambda i, t: (t[i], 0, 0)),
            ],
            # Constant block index => output stays resident in VMEM (accumulator),
            # written back to HBM once after the last grid step.
            out_specs=pl.BlockSpec((1, 1), lambda i, t: (0, 0)),
        ),
        compiler_params=pltpu.CompilerParams(
            dimension_semantics=("arbitrary",),     # reduction into the output
            vmem_limit_bytes=32 * 1024 * 1024,      # explicit, safe on v5e/v6e/v7x
        ),
        cost_estimate=cost,
    )(t, x3, c3)
    return out[0, 0]


def _reference(inputs, center, targets):
    # Pure-JAX reference mirroring the PyTorch forward exactly.
    B = inputs.shape[0]
    C = center.shape[0]
    diff = inputs[:, None, :] - center[None, :, :]
    dist = jnp.sqrt(jnp.sum(diff * diff, axis=-1))
    mask = (targets[:, None] == jnp.arange(C)[None, :]).astype(jnp.float32)
    return jnp.sum(jnp.clip(dist * mask, 1e-12, 1e12)) / B


if __name__ == "__main__":
    key = jax.random.PRNGKey(0)
    k_center, k_inputs, k_targets = jax.random.split(key, 3)

    num_classes = 16
    feature_dim = 32
    batch_size = 8

    # Deterministic init (matches torch.randn((num_classes, feature_dim)) shape).
    center = jax.random.normal(k_center, (num_classes, feature_dim), dtype=jnp.float32)
    inputs = jax.random.normal(k_inputs, (batch_size, feature_dim), dtype=jnp.float32)
    targets = jax.random.randint(k_targets, (batch_size,), 0, num_classes, dtype=jnp.int32)

    loss = jax.block_until_ready(center_loss(inputs, center, targets))
    ref = jax.block_until_ready(_reference(inputs, center, targets))

    assert jnp.allclose(loss, ref, rtol=1e-5, atol=1e-5), (loss, ref)
    print("KERNEL_OK")
</pallas_src>

<mosaic_0001>
module attributes {stable_mosaic.version = 11 : i64} {
  func.func @_center_loss_kernel(%arg0: i32, %arg1: memref<8xi32, #tpu.memory_space<smem>>, %arg2: memref<1x1x32xf32, #tpu.memory_space<vmem>>, %arg3: memref<1x1x32xf32, #tpu.memory_space<vmem>>, %arg4: memref<1x1xf32, #tpu.memory_space<vmem>>) attributes {dimension_semantics = [#tpu.dimension_semantics<arbitrary>], iteration_bounds = array<i64: 8>, scalar_prefetch = 1 : i64, scratch_operands = 0 : i64, tpu.core_type = #tpu.core_type<tc>, window_params = [{transform_indices = @transform_0, window_bounds = array<i64: 1, 1, 32>}, {transform_indices = @transform_1, window_bounds = array<i64: 1, 1, 32>}, {pipeline_mode = #tpu.pipeline_mode<synchronous>, transform_indices = @transform_2, window_bounds = array<i64: 1, 1>}]} {
    %c0_i32 = arith.constant 0 : i32
    %0 = arith.cmpi eq, %arg0, %c0_i32 : i32
    %1 = arith.extui %0 : i1 to i32
    %c0_i32_0 = arith.constant 0 : i32
    %2 = arith.cmpi ne, %1, %c0_i32_0 : i32
    scf.if %2 {
      %cst_13 = arith.constant 0.000000e+00 : f32
      %19 = vector.broadcast %cst_13 : f32 to vector<1x1xf32>
      %c0_14 = arith.constant 0 : index
      %c0_15 = arith.constant 0 : index
      %20 = vector.load %arg4[%c0_14, %c0_15] : memref<1x1xf32, #tpu.memory_space<vmem>>, vector<1x1xf32>
      tpu.vector_store %arg4[%c0_14, %c0_15], %19 {strides = array<i32>} : memref<1x1xf32, #tpu.memory_space<vmem>>, vector<1x1xf32>,
    } else {
    }
    %c0 = arith.constant 0 : index
    %c0_1 = arith.constant 0 : index
    %c0_2 = arith.constant 0 : index
    %3 = vector.load %arg2[%c0, %c0_1, %c0_2] : memref<1x1x32xf32, #tpu.memory_space<vmem>>, vector<1x1x32xf32>
    %c0_3 = arith.constant 0 : index
    %c0_4 = arith.constant 0 : index
    %c0_5 = arith.constant 0 : index
    %4 = vector.load %arg3[%c0_3, %c0_4, %c0_5] : memref<1x1x32xf32, #tpu.memory_space<vmem>>, vector<1x1x32xf32>
    %5 = arith.subf %3, %4 : vector<1x1x32xf32>
    %6 = arith.mulf %5, %5 : vector<1x1x32xf32>
    %cst = arith.constant dense<0.000000e+00> : vector<1x1xf32>
    %7 = vector.multi_reduction <add>, %6, %cst [2] : vector<1x1x32xf32> to vector<1x1xf32>
    %8 = math.sqrt %7 : vector<1x1xf32>
    %cst_6 = arith.constant 9.99999996E-13 : f32
    %cst_7 = arith.constant 9.99999995E+11 : f32
    %9 = vector.broadcast %cst_6 : f32 to vector<1x1xf32>
    %10 = arith.maximumf %9, %8 : vector<1x1xf32>
    %11 = vector.broadcast %cst_7 : f32 to vector<1x1xf32>
    %12 = arith.minimumf %11, %10 : vector<1x1xf32>
    %c0_8 = arith.constant 0 : index
    %c0_9 = arith.constant 0 : index
    %13 = vector.load %arg4[%c0_8, %c0_9] : memref<1x1xf32, #tpu.memory_space<vmem>>, vector<1x1xf32>
    %14 = arith.addf %13, %12 : vector<1x1xf32>
    %c0_10 = arith.constant 0 : index
    %c0_11 = arith.constant 0 : index
    %15 = vector.load %arg4[%c0_10, %c0_11] : memref<1x1xf32, #tpu.memory_space<vmem>>, vector<1x1xf32>
    tpu.vector_store %arg4[%c0_10, %c0_11], %14 {strides = array<i32>} : memref<1x1xf32, #tpu.memory_space<vmem>>, vector<1x1xf32>,
    %c7_i32 = arith.constant 7 : i32
    %16 = arith.cmpi eq, %arg0, %c7_i32 : i32
    %17 = arith.extui %16 : i1 to i32
    %c0_i32_12 = arith.constant 0 : i32
    %18 = arith.cmpi ne, %17, %c0_i32_12 : i32
    scf.if %18 {
      %cst_13 = arith.constant 1.200000e+02 : f32
      %cst_14 = arith.constant 9.99999996E-13 : f32
      %19 = arith.mulf %cst_13, %cst_14 : f32
      %c0_15 = arith.constant 0 : index
      %c0_16 = arith.constant 0 : index
      %20 = vector.load %arg4[%c0_15, %c0_16] : memref<1x1xf32, #tpu.memory_space<vmem>>, vector<1x1xf32>
      %21 = vector.broadcast %19 : f32 to vector<1x1xf32>
      %22 = arith.addf %20, %21 : vector<1x1xf32>
      %cst_17 = arith.constant 8.000000e+00 : f32
      %23 = vector.broadcast %cst_17 : f32 to vector<1x1xf32>
      %24 = arith.divf %22, %23 : vector<1x1xf32>
      %c0_18 = arith.constant 0 : index
      %c0_19 = arith.constant 0 : index
      %25 = vector.load %arg4[%c0_18, %c0_19] : memref<1x1xf32, #tpu.memory_space<vmem>>, vector<1x1xf32>
      tpu.vector_store %arg4[%c0_18, %c0_19], %24 {strides = array<i32>} : memref<1x1xf32, #tpu.memory_space<vmem>>, vector<1x1xf32>,
    } else {
    }
    return
  }
  func.func @transform_0(%arg0: i32, %arg1: memref<8xi32, #tpu.memory_space<smem>>) -> (i32, i32, i32) {
    %c0_i32 = arith.constant 0 : i32
    %c0_i32_0 = arith.constant 0 : i32
    %c0_i32_1 = arith.constant 0 : i32
    return %arg0, %c0_i32, %c0_i32_0 : i32, i32, i32
  }
  func.func @transform_1(%arg0: i32, %arg1: memref<8xi32, #tpu.memory_space<smem>>) -> (i32, i32, i32) {
    %0 = arith.index_cast %arg0 : i32 to index
    %1 = memref.load %arg1[%0] : memref<8xi32, #tpu.memory_space<smem>>
    %c0_i32 = arith.constant 0 : i32
    %c0_i32_0 = arith.constant 0 : i32
    %c0_i32_1 = arith.constant 0 : i32
    return %1, %c0_i32, %c0_i32_0 : i32, i32, i32
  }
  func.func @transform_2(%arg0: i32, %arg1: memref<8xi32, #tpu.memory_space<smem>>) -> (i32, i32) {
    %c0_i32 = arith.constant 0 : i32
    %c0_i32_0 = arith.constant 0 : i32
    %c0_i32_1 = arith.constant 0 : i32
    return %c0_i32, %c0_i32_0 : i32, i32
  }
}

</mosaic_0001>

<llo_original>
// kernel: tpu_custom_call.1
$region0: #{tpu_custom_call.1}
  #allocation0 [shape = 'u32[]', space=smem, size = 0x4, offset = 0x4, fixed_abs, tag = 'smem constant byte address 0x4 - core index']
  #allocation1 [shape = 'u32[72,128]{1,0:T(1,128)}', space=vmem, size = 0x9000, scoped, tag = 'internal scratch']
  #allocation2 [shape = 's32[1]{0}', space=sflag, size = 0x4, scoped, tag = 'scoped memory for tpu_custom_call.1']
  #allocation3 [shape = 'u8[512]{0}', space=smem, size = 0x200, scoped, tag = 'prefetched SMEM operand 0']
  %s0 = inlined_call_operand.hbm [shape: s32[8], index: 0, kind: input, shape index: {}]
  %s1 = inlined_call_operand.hbm [shape: f32[8,1,32], index: 1, kind: input, shape index: {}]
  %s2 = inlined_call_operand.hbm [shape: f32[16,1,32], index: 2, kind: input, shape index: {}]
  %s3 = inlined_call_operand.hbm [shape: f32[1,1], index: 3, kind: output, shape index: {}]
  %s4 = sld [smem:[#allocation0]]
  $region57: #{tpu_custom_call.1} parent=0
    _
  %s6 = ssub.s32 1, %s4
  %s7 = scalar_select 0, %s6, %s4
  %s9 = sshll.u32 %s0, 4
  %s10 = int_to_ptr.hbm [resolvable:$true] %s9
  %12 = dma.hbm_to_smem %s10, 16, [#allocation3], [#allocation2]
  %14 = dma.done [#allocation2], 16
  %15 = sfence
  $region1: #{tpu_custom_call.1} parent=0
    #allocation4 [shape = 'u8[1024]{0}', space=vmem, size = 0x400, scoped, tag = 'input window, operand 1']
    #allocation5 [shape = 's32[2]{0}', space=sflag, size = 0x8, scoped, tag = 'scoped memory for tpu_custom_call.1']
    #allocation6 [shape = 's32[2]{0}', space=sflag, size = 0x8, scoped, tag = 'scoped memory for tpu_custom_call.1']
    #allocation7 [shape = 'u8[1024]{0}', space=vmem, size = 0x400, scoped, tag = 'input window, operand 2']
    #allocation8 [shape = 's32[2]{0}', space=sflag, size = 0x8, scoped, tag = 'scoped memory for tpu_custom_call.1']
    #allocation9 [shape = 'u8[512]{0}', space=vmem, size = 0x400, scoped, tag = 'output window, operand 0, single buffered']
    %16 = vsyncpa [#allocation5], 0
    %s17 = scalar_lea.sflag [#allocation5], 1
    %18 = vsyncpa %s17, 0
    %19 = vsyncpa [#allocation8], 0
    %s20 = scalar_lea.sflag [#allocation8], 1
    %21 = vsyncpa %s20, 0
    %22 = vsyncpa [#allocation6], 0
    loop: start=0, step=1, limit=10
    $region2: #{tpu_custom_call.1} parent=1 // loop_pre_header
      _
    $region3: #{tpu_custom_call.1} parent=1 // loop_header
      %s24 = sphi 0, %s28
      %p25 = scmp.ge.s32.totalorder %s24, 10
      %s34 = sphi 0, %s36
      %s37 = sphi 0, %s34
      %s38 = sphi 0, %s37
      %s54 = sphi 0, %s38
      %s62 = sphi 0, %s64
      %s65 = sphi 0, %s62
      %s66 = sphi 0, %s65
      %s82 = sphi 0, %s66
      %s86 = sphi 0, %s86
      %s88 = sphi 0, %s86
      %s89 = sphi 0, %s88
      %s103 = sphi 0, %s89
    $region4: #{tpu_custom_call.1} parent=1 // loop_header_branch
      %27 = sbr.rel (%p25) target = $region8
    $region5: #{tpu_custom_call.1} parent=1 // loop_body
      %s29 = ssub.s32 %s24, 1
      %s30 = ssub.s32 %s24, 2
      %s31 = sadd.s32 %s24, 1
      %s32 = ssub.s32 %s24, %s31
      %p33 = scmp.eq.s32.totalorder %s32, 0
      %s35 = sadd.s32 %s34, 1
      %s36 = scalar_select %p33, %s34, %s35
      %p39 = pneg %p33
      %p40 = scmp.eq.s32.totalorder %s24, 7
      %p41 = por %p39, %p40
      %p42 = scmp.ne.s32.totalorder %s34, %s37
      %p43 = scmp.eq.s32.totalorder %s24, 0
      %p44 = por %p42, %p43
      %p45 = scmp.ne.s32.totalorder %s34, %s37
      %p46 = scmp.eq.s32.totalorder %s29, 7
      %p47 = por %p45, %p46
      %p48 = scmp.ne.s32.totalorder %s37, %s38
      %p49 = scmp.eq.s32.totalorder %s29, 0
      %p50 = por %p48, %p49
      %p51 = scmp.ne.s32.totalorder %s37, %s38
      %p52 = scmp.eq.s32.totalorder %s30, 7
      %p53 = por %p51, %p52
      %p55 = scmp.ne.s32.totalorder %s38, %s54
      %p56 = scmp.eq.s32.totalorder %s30, 0
      %p57 = por %p55, %p56
      %s58 = sld [smem:[#allocation3 + %s24]]
      %s59 = sld [smem:[#allocation3 + %s31]]
      %s60 = ssub.s32 %s58, %s59
      %p61 = scmp.eq.s32.totalorder %s60, 0
      %s63 = sadd.s32 %s62, 1
      %s64 = scalar_select %p61, %s62, %s63
      %p67 = pneg %p61
      %p68 = scmp.eq.s32.totalorder %s24, 7
      %p69 = por %p67, %p68
      %p70 = scmp.ne.s32.totalorder %s62, %s65
      %p71 = scmp.eq.s32.totalorder %s24, 0
      %p72 = por %p70, %p71
      %p73 = scmp.ne.s32.totalorder %s62, %s65
      %p74 = scmp.eq.s32.totalorder %s29, 7
      %p75 = por %p73, %p74
      %p76 = scmp.ne.s32.totalorder %s65, %s66
      %p77 = scmp.eq.s32.totalorder %s29, 0
      %p78 = por %p76, %p77
      %p79 = scmp.ne.s32.totalorder %s65, %s66
      %p80 = scmp.eq.s32.totalorder %s30, 7
      %p81 = por %p79, %p80
      %p83 = scmp.ne.s32.totalorder %s66, %s82
      %p84 = scmp.eq.s32.totalorder %s30, 0
      %p85 = por %p83, %p84
      %s87 = sadd.s32 %s86, 1
      %p90 = scmp.eq.s32.totalorder %s24, 7
      %p91 = scmp.ne.s32.totalorder %s86, %s88
      %p92 = scmp.eq.s32.totalorder %s24, 0
      %p93 = por %p91, %p92
      %p94 = scmp.ne.s32.totalorder %s86, %s88
      %p95 = scmp.eq.s32.totalorder %s29, 7
      %p96 = por %p94, %p95
      %p97 = scmp.ne.s32.totalorder %s88, %s89
      %p98 = scmp.eq.s32.totalorder %s29, 0
      %p99 = por %p97, %p98
      %p100 = scmp.ne.s32.totalorder %s88, %s89
      %p101 = scmp.eq.s32.totalorder %s30, 7
      %p102 = por %p100, %p101
      %p104 = scmp.ne.s32.totalorder %s89, %s103
      %p105 = scmp.eq.s32.totalorder %s30, 0
      %p106 = por %p104, %p105
      %p107 = scmp.le.s32.totalorder 1, %s24
      %p108 = scmp.lt.s32.totalorder %s24, 9
      %p109 = pnand %p107, %p108
      %p110 = pneg %p109
      // Predicated region
      $region9: #{tpu_custom_call.1} parent=5 // pred_check
        _
      $region10: #{tpu_custom_call.1} parent=5 // pred_check_branch
        %112 = sbr.rel (%p109) target = $region12
      $region11: #{tpu_custom_call.1} parent=5 // pred_region
        %s113 = ssub.s32 %s24, 1
      $region12: #{tpu_custom_call.1} parent=5 // pred_fallthru
        _
      %p114 = scmp.lt.s32.totalorder %s24, 8
      // Predicated region
      $region13: #{tpu_custom_call.1} parent=5 // pred_check
        %p115 = pneg %p114
      $region14: #{tpu_custom_call.1} parent=5 // pred_check_branch
        %117 = sbr.rel (%p115) target = $region16
      $region15: #{tpu_custom_call.1} parent=5 // pred_region
        // Predicated region
        $region17: #{tpu_custom_call.1} parent=15 // pred_check
          %p118 = pneg %p44
        $region18: #{tpu_custom_call.1} parent=15 // pred_check_branch
          %120 = sbr.rel (%p118) target = $region20
        $region19: #{tpu_custom_call.1} parent=15 // pred_region
          %s121 = sand.u32 %s34, 1
          %s122 = scalar_lea.sflag [#allocation5], %s121
          %s123 = sand.u32 %s34, 1
          %s124 = scalar_lea.vmem [#allocation4], %s123
          %126 = vsyncadd %s122, 0
          %s127 = scalar_lea.hbm %s1, %s24
          %s129 = sshll.u32 %s127, 4
          %s130 = int_to_ptr.hbm [resolvable:$true] %s129
          %s131 = sshll.u32 %s124, 4
          %s132 = int_to_ptr.vmem [resolvable:$true] %s131
          %134 = dma.hbm_to_vmem [thread:$0]  %s130, 16, %s132, %s122
        $region20: #{tpu_custom_call.1} parent=15 // pred_fallthru
          _
        // Predicated region
        $region21: #{tpu_custom_call.1} parent=15 // pred_check
          %p135 = pneg %p72
        $region22: #{tpu_custom_call.1} parent=15 // pred_check_branch
          %137 = sbr.rel (%p135) target = $region24
        $region23: #{tpu_custom_call.1} parent=15 // pred_region
          %s138 = sand.u32 %s62, 1
          %s139 = scalar_lea.sflag [#allocation8], %s138
          %s140 = sand.u32 %s62, 1
          %s141 = scalar_lea.vmem [#allocation7], %s140
          %s142 = sld [smem:[#allocation3 + %s24]]
          %144 = vsyncadd %s139, 0
          %s145 = scalar_lea.hbm %s2, %s142
          %s147 = sshll.u32 %s145, 4
          %s148 = int_to_ptr.hbm [resolvable:$true] %s147
          %s149 = sshll.u32 %s141, 4
          %s150 = int_to_ptr.vmem [resolvable:$true] %s149
          %152 = dma.hbm_to_vmem [thread:$0]  %s148, 16, %s150, %s139
        $region24: #{tpu_custom_call.1} parent=15 // pred_fallthru
          _
      $region16: #{tpu_custom_call.1} parent=5 // pred_fallthru
        _
      %p153 = scmp.le.s32.totalorder 1, %s24
      %p154 = scmp.lt.s32.totalorder %s24, 9
      %p155 = pnand %p153, %p154
      %p156 = pneg %p155
      // Predicated region
      $region25: #{tpu_custom_call.1} parent=5 // pred_check
        _
      $region26: #{tpu_custom_call.1} parent=5 // pred_check_branch
        %158 = sbr.rel (%p155) target = $region28
      $region27: #{tpu_custom_call.1} parent=5 // pred_region
        %s159 = ssub.s32 %s24, 1
        %s160 = sand.u32 %s37, 1
        %s161 = scalar_lea.sflag [#allocation5], %s160
        %s162 = sand.u32 %s37, 1
        %s163 = scalar_lea.vmem [#allocation4], %s162
        // Predicated region
        $region29: #{tpu_custom_call.1} parent=27 // pred_check
          %p164 = pneg %p50
        $region30: #{tpu_custom_call.1} parent=27 // pred_check_branch
          %166 = sbr.rel (%p164) target = $region32
        $region31: #{tpu_custom_call.1} parent=27 // pred_region
          %168 = dma.done %s161, 16
        $region32: #{tpu_custom_call.1} parent=27 // pred_fallthru
          _
        %s169 = sand.u32 %s65, 1
        %s170 = scalar_lea.sflag [#allocation8], %s169
        %s171 = sand.u32 %s65, 1
        %s172 = scalar_lea.vmem [#allocation7], %s171
        // Predicated region
        $region33: #{tpu_custom_call.1} parent=27 // pred_check
          %p173 = pneg %p78
        $region34: #{tpu_custom_call.1} parent=27 // pred_check_branch
          %175 = sbr.rel (%p173) target = $region36
        $region35: #{tpu_custom_call.1} parent=27 // pred_region
          %177 = dma.done %s170, 16
        $region36: #{tpu_custom_call.1} parent=27 // pred_fallthru
          _
        %s178 = sand.u32 %s37, 1
        %s179 = scalar_lea.sflag [#allocation5], %s178
        %s180 = sand.u32 %s37, 1
        %s181 = scalar_lea.vmem [#allocation4], %s180
        %p182 = pneg %p50
        %p183 = pneg %p47
        %s184 = sand.u32 %s65, 1
        %s185 = scalar_lea.sflag [#allocation8], %s184
        %s186 = sand.u32 %s65, 1
        %s187 = scalar_lea.vmem [#allocation7], %s186
        %p188 = pneg %p78
        %p189 = pneg %p75
        %p190 = pneg %p99
        %p191 = pneg %p96
        %s192 = sld [smem:[#allocation3 + %s29]]
        %p193 = scmp.eq.s32.totalorder %s29, 0
        // Predicated region
        $region37: #{tpu_custom_call.1} parent=27 // pred_check
          %p194 = pneg %p193
        $region38: #{tpu_custom_call.1} parent=27 // pred_check_branch
          %196 = sbr.rel (%p194) target = $region40
        $region39: #{tpu_custom_call.1} parent=27 // pred_region
          %vm197 = vcmask 0
          %198 = vst.msk [vmem:[#allocation9] sm:$0x1] %vm197, 0.0
        $region40: #{tpu_custom_call.1} parent=27 // pred_fallthru
          _
        %v199 = vld [vmem:[%s163] sm:$0x1]
        %v200 = vld [vmem:[%s172] sm:$0x1]
        %v201 = vsub.f32 %v199, %v200
        %v202 = vmul.f32 %v201, %v201
        %vm203 = vcmask 253952
        %v204 = vsel %vm203, %v202, 0.0
        %205 = vadd.xlane.f32.xlu0 %v204
        %v206 = vpop.xlane.xlu0 %205
        %v207 = vrsqrt.pop %v206
        %v208 = vmul.f32 %v207, %v206
        %v209 = vmul.f32 %v208, %v207
        %v210 = vmul.f32 0.5, %v209
        %v211 = vsub.f32 1.5, %v210
        %v212 = vmul.f32 %v207, %v211
        %v213 = vmul.f32 %v206, %v212
        %vm214 = vcmp.eq.f32.partialorder %v206, inf
        %v215 = vsel %vm214, %v206, %v213
        %vm216 = vcmp.eq.f32.partialorder %v206, 0.0
        %v217 = vand.u32 %v206, 2147483648
        %v218 = vsel %vm216, %v217, %v215
        %v219 = vmax.f32 %v218, 1e-12
        %v220 = vmin.f32 %v219, 1e+12
        %v221 = vld [vmem:[#allocation9] sm:$0x1]
        %v222 = vadd.f32 %v221, %v220
        %vm223 = vcmask 0
        %224 = vst.msk [vmem:[#allocation9] sm:$0x1] %vm223, %v222
        %p225 = scmp.eq.s32.totalorder %s29, 7
        // Predicated region
        $region41: #{tpu_custom_call.1} parent=27 // pred_check
          %p226 = pneg %p225
        $region42: #{tpu_custom_call.1} parent=27 // pred_check_branch
          %228 = sbr.rel (%p226) target = $region44
        $region43: #{tpu_custom_call.1} parent=27 // pred_region
          %v229 = vld [vmem:[#allocation9] sm:$0x1]
          %v230 = vadd.f32 %v229, 1.2e-10
          %v231 = vrcp.pop 8.0
          %v232 = vmul.f32 8.0, %v231
          %v233 = vsub.f32 1.0, %v232
          %v234 = vmul.f32 %v231, %v233
          %v235 = vadd.f32 %v231, %v234
          %vm236 = vweird.f32 %v231
          %v237 = vsel %vm236, %v231, %v235
          %v238 = vmul.f32 %v230, %v237
          %239 = vst.msk [vmem:[#allocation9] sm:$0x1] %vm223, %v238
        $region44: #{tpu_custom_call.1} parent=27 // pred_fallthru
          _
        // Predicated region
        $region45: #{tpu_custom_call.1} parent=27 // pred_check
          %p240 = pneg %p96
        $region46: #{tpu_custom_call.1} parent=27 // pred_check_branch
          %242 = sbr.rel (%p240) target = $region48
        $region47: #{tpu_custom_call.1} parent=27 // pred_region
          %244 = vsyncadd [#allocation6], 0
          %s246 = sshll.u32 [#allocation9], 4
          %s247 = int_to_ptr.vmem [resolvable:$true] %s246
          %s248 = sshll.u32 %s3, 4
          %s249 = int_to_ptr.hbm [resolvable:$true] %s248
          %251 = dma.vmem_to_hbm [thread:$0]  %s247, 16, %s249, [#allocation6]
        $region48: #{tpu_custom_call.1} parent=27 // pred_fallthru
          _
        // Predicated region
        $region49: #{tpu_custom_call.1} parent=27 // pred_check
          %p252 = pneg %p96
        $region50: #{tpu_custom_call.1} parent=27 // pred_check_branch
          %254 = sbr.rel (%p252) target = $region52
        $region51: #{tpu_custom_call.1} parent=27 // pred_region
          %256 = dma.done [#allocation6], 16
        $region52: #{tpu_custom_call.1} parent=27 // pred_fallthru
          _
      $region28: #{tpu_custom_call.1} parent=5 // pred_fallthru
        _
      %p257 = scmp.le.s32.totalorder 2, %s24
      // Predicated region
      $region53: #{tpu_custom_call.1} parent=5 // pred_check
        %p258 = pneg %p257
      $region54: #{tpu_custom_call.1} parent=5 // pred_check_branch
        %260 = sbr.rel (%p258) target = $region56
      $region55: #{tpu_custom_call.1} parent=5 // pred_region
        %s261 = ssub.s32 %s24, 2
      $region56: #{tpu_custom_call.1} parent=5 // pred_fallthru
        _
    $region6: #{tpu_custom_call.1} parent=1 // loop_footer
      %s28 = sadd.s32 1, %s24
    $region7: #{tpu_custom_call.1} parent=1 // loop_footer_branch
      %23 = sbr.rel target = $region3
    $region8: #{tpu_custom_call.1} parent=1 // loop_exit
      _
    %262 = vsyncpa [#allocation5], 1
    %s263 = scalar_lea.sflag [#allocation5], 1
    %264 = vsyncpa %s263, 1
    %265 = vsyncpa [#allocation8], 1
    %s266 = scalar_lea.sflag [#allocation8], 1
    %267 = vsyncpa %s266, 1
    %268 = vsyncpa [#allocation6], 1
    %s269 = scalar_lea.sflag [#allocation6], 1
    %270 = vsyncpa %s269, 1

</llo_original>
